<compile_context>
chip_gen: v7x
topology: tpu7x:2x2x1
jax: 0.10.0
libtpu: 0.0.40
codegen_flags: <defaults>
</compile_context>

<pallas_src>
import functools

import jax
import jax.numpy as jnp
from jax import lax
from jax.experimental import pallas as pl
from jax.experimental.pallas import tpu as pltpu


def _round_up(x: int, m: int) -> int:
    return (x + m - 1) // m * m


def _rope_cache_kernel(sub_ref, freq_ref, cos_ref, sin_ref, *,
                       r, inv_scale, block_rows, half_width_compute):
    """Writes one (block_rows, W) tile of the duplicated cos/sin cache.

    sub_ref : (1, Wc) f32 -- folded sub-position of each lane (lane // dim); zeros if r == 1.
    freq_ref: (1, Wc) f32 -- inv_freq value assigned to each lane.
    cos_ref/sin_ref: (block_rows, W) output tiles.
      * folded path (half_width_compute=False): Wc == W, one full-width unmasked store.
      * half path   (half_width_compute=True):  Wc == W//2, cos/sin computed once on the first
        half lanes, stored to both halves (exploits the concat([freqs, freqs]) structure).
    """
    i = pl.program_id(0)
    # (block_rows, 1) column of absolute folded-row indices (feedback #6: column iota, not a
    # full-tile iota).  Exact in f32 for seq_len < 2**24.
    row0 = (i * block_rows).astype(jnp.float32)
    row = lax.broadcasted_iota(jnp.int32, (block_rows, 1), 0).astype(jnp.float32) + row0
    # Absolute sequence position of every element, then the angle (f32 throughout).
    pos = row * jnp.float32(r) + sub_ref[...]          # (block_rows, Wc) via broadcast
    t = pos * jnp.float32(inv_scale)
    angle = t * freq_ref[...]
    c = jnp.cos(angle)
    s = jnp.sin(angle)
    if half_width_compute:
        half = freq_ref.shape[-1]
        cos_ref[:, :half] = c.astype(cos_ref.dtype)    # write the same values to both halves
        cos_ref[:, half:] = c.astype(cos_ref.dtype)
        sin_ref[:, :half] = s.astype(sin_ref.dtype)
        sin_ref[:, half:] = s.astype(sin_ref.dtype)
    else:
        cos_ref[...] = c.astype(cos_ref.dtype)
        sin_ref[...] = s.astype(sin_ref.dtype)


def rotary_embedding_forward(
    x: jax.Array,
    seq_len: int,
    *,
    dim: int,
    base: float = 10000.0,
    scale_factor: float = 1.0,
    max_block_rows: int = 1024,
):
    """Returns (cos, sin), each of shape (1, 1, seq_len, dim), dtype == x.dtype."""
    assert dim % 2 == 0, "rotary dim must be even"
    half = dim // 2
    out_dtype = x.dtype
    itemsize = jnp.dtype(out_dtype).itemsize

    # inv_freq exactly as the module computes it (f32).
    inv_freq = 1.0 / (base ** (jnp.arange(0, dim, 2, dtype=jnp.float32) / dim))  # (half,)

    # ---- layout selection (feedback #1 / #3) ----------------------------------------------
    half_width_compute = (half % 128 == 0)          # dim >= 256: genuine transcendental halving
    if (not half_width_compute) and dim < 128 and (128 % dim == 0):
        r = 128 // dim                              # fold r positions per row -> lane-dense
    else:
        r = 1
    W = r * dim                                     # output slab width (lanes)

    if half_width_compute:
        wc = half
        freq_row = inv_freq[None, :]                                    # (1, half)
        sub_row = jnp.zeros((1, wc), jnp.float32)
    else:
        wc = W
        lane = jnp.arange(W)
        freq_row = inv_freq[(lane % dim) % half][None, :]               # (1, W)
        sub_row = (lane // dim).astype(jnp.float32)[None, :]            # (1, W)

    # ---- block / grid selection (feedback #2 / #4) ----------------------------------------
    rows_total = pl.cdiv(seq_len, r)
    if rows_total >= 128:
        n_blocks = max(2, pl.cdiv(rows_total, max_block_rows))   # >=2 steps: megacore on v7x
        block_rows = _round_up(pl.cdiv(rows_total, n_blocks), 16)
    else:
        n_blocks = 1
        block_rows = rows_total
    rows_padded = block_rows * n_blocks             # kernel may write a few padded rows

    kernel = functools.partial(
        _rope_cache_kernel,
        r=r,
        inv_scale=float(1.0 / scale_factor),
        block_rows=block_rows,
        half_width_compute=half_width_compute,
    )

    # ---- cost estimate (feedback #8) --------------------------------------------------------
    n_compute = n_blocks * block_rows * wc
    cost = pl.CostEstimate(
        flops=3 * n_compute,
        transcendentals=2 * n_compute,                                 # one cos + one sin each
        bytes_accessed=2 * rows_padded * W * itemsize + 2 * wc * 4,
    )

    cos2d, sin2d = pl.pallas_call(
        kernel,
        out_shape=(
            jax.ShapeDtypeStruct((rows_padded, W), out_dtype),
            jax.ShapeDtypeStruct((rows_padded, W), out_dtype),
        ),
        grid_spec=pltpu.PrefetchScalarGridSpec(
            num_scalar_prefetch=0,
            grid=(n_blocks,),
            in_specs=[
                pl.BlockSpec((1, wc), lambda i: (0, 0)),
                pl.BlockSpec((1, wc), lambda i: (0, 0)),
            ],
            out_specs=[
                pl.BlockSpec((block_rows, W), lambda i: (i, 0)),
                pl.BlockSpec((block_rows, W), lambda i: (i, 0)),
            ],
        ),
        compiler_params=pltpu.CompilerParams(
            dimension_semantics=("parallel",),
            vmem_limit_bytes=32 * 1024 * 1024,       # feedback #5: explicit, portable to v7x
        ),
        cost_estimate=cost,
    )(sub_row, freq_row)

    # (rows_padded, r*dim) -> (rows_padded*r, dim) is a contiguous (free) reshape.
    cos = cos2d.reshape(rows_padded * r, dim)
    sin = sin2d.reshape(rows_padded * r, dim)
    if rows_padded * r != seq_len:                   # non-multiple seq_len: drop padded rows
        cos = cos[:seq_len]
        sin = sin[:seq_len]
    return cos[None, None, :, :], sin[None, None, :, :]


def _reference(x, seq_len, *, dim, base=10000.0, scale_factor=1.0):
    inv_freq = 1.0 / (base ** (jnp.arange(0, dim, 2, dtype=jnp.float32) / dim))
    t = jnp.arange(seq_len, dtype=jnp.float32) / scale_factor
    freqs = jnp.einsum("i,j->ij", t, inv_freq)
    emb = jnp.concatenate([freqs, freqs], axis=-1)
    cos = jnp.cos(emb)[None, None, :, :].astype(x.dtype)
    sin = jnp.sin(emb)[None, None, :, :].astype(x.dtype)
    return cos, sin


if __name__ == "__main__":
    key = jax.random.PRNGKey(0)

    # --- primary small config (folded lane-dense path: dim=32 -> r=4, W=128) ---------------
    batch, heads, seq_len, dim = 2, 4, 8, 32
    x = jax.random.normal(key, (batch, heads, seq_len, dim), dtype=jnp.float32)
    cos, sin = rotary_embedding_forward(x, seq_len, dim=dim, base=10000.0, scale_factor=1.0)
    jax.block_until_ready((cos, sin))
    cos_ref, sin_ref = _reference(x, seq_len, dim=dim)
    assert cos.shape == (1, 1, seq_len, dim) and sin.shape == (1, 1, seq_len, dim)
    assert cos.dtype == x.dtype and sin.dtype == x.dtype
    assert jnp.allclose(cos, cos_ref, atol=1e-5, rtol=1e-5)
    assert jnp.allclose(sin, sin_ref, atol=1e-5, rtol=1e-5)

    # --- non-multiple seq_len, multi-step parallel grid (dim=64 -> r=2) ---------------------
    seq_len2, dim2 = 300, 64
    x2 = jnp.ones((1, 1, seq_len2, dim2), dtype=jnp.float32)
    cos2, sin2 = rotary_embedding_forward(x2, seq_len2, dim=dim2)
    cos2_ref, sin2_ref = _reference(x2, seq_len2, dim=dim2)
    assert cos2.shape == (1, 1, seq_len2, dim2)
    # f32 sin/cos of arguments up to ~300: allow a few ulps of angle-sized error.
    assert jnp.allclose(cos2, cos2_ref, atol=2e-4, rtol=0)
    assert jnp.allclose(sin2, sin2_ref, atol=2e-4, rtol=0)

    # --- half-width-compute path (dim >= 256) with bf16 outputs ------------------------------
    seq_len3, dim3 = 64, 256
    x3 = jnp.ones((1, 1, seq_len3, dim3), dtype=jnp.bfloat16)
    cos3, sin3 = rotary_embedding_forward(x3, seq_len3, dim=dim3)
    cos3_ref, sin3_ref = _reference(x3, seq_len3, dim=dim3)
    assert cos3.dtype == jnp.bfloat16 and sin3.dtype == jnp.bfloat16
    assert jnp.allclose(cos3.astype(jnp.float32), cos3_ref.astype(jnp.float32), atol=2e-2, rtol=0)
    assert jnp.allclose(sin3.astype(jnp.float32), sin3_ref.astype(jnp.float32), atol=2e-2, rtol=0)

    jax.block_until_ready((cos2, sin2, cos3, sin3))
    print("KERNEL_OK")
</pallas_src>

<mosaic_0001>
module attributes {stable_mosaic.version = 11 : i64} {
  func.func @_rope_cache_kernel(%arg0: i32, %arg1: memref<1x128xf32, #tpu.memory_space<vmem>>, %arg2: memref<1x128xf32, #tpu.memory_space<vmem>>, %arg3: memref<2x128xf32, #tpu.memory_space<vmem>>, %arg4: memref<2x128xf32, #tpu.memory_space<vmem>>) attributes {dimension_semantics = [#tpu.dimension_semantics<parallel>], iteration_bounds = array<i64: 1>, scalar_prefetch = 0 : i64, scratch_operands = 0 : i64, tpu.core_type = #tpu.core_type<tc>, window_params = [{pipeline_mode = #tpu.pipeline_mode<synchronous>, transform_indices = @transform_0, window_bounds = array<i64: 1, 128>}, {pipeline_mode = #tpu.pipeline_mode<synchronous>, transform_indices = @transform_1, window_bounds = array<i64: 1, 128>}, {transform_indices = @transform_2, window_bounds = array<i64: 2, 128>}, {transform_indices = @transform_3, window_bounds = array<i64: 2, 128>}]} {
    %c2_i32 = arith.constant 2 : i32
    %0 = arith.muli %arg0, %c2_i32 : i32
    %1 = arith.sitofp %0 : i32 to f32
    %2 = tpu.iota {dimensions = array<i32: 0>} : vector<2x1xi32>
    %3 = arith.sitofp %2 : vector<2x1xi32> to vector<2x1xf32>
    %4 = vector.broadcast %1 : f32 to vector<2x1xf32>
    %5 = arith.addf %3, %4 : vector<2x1xf32>
    %cst = arith.constant 4.000000e+00 : f32
    %6 = vector.broadcast %cst : f32 to vector<2x1xf32>
    %7 = arith.mulf %5, %6 : vector<2x1xf32>
    %c0 = arith.constant 0 : index
    %c0_0 = arith.constant 0 : index
    %8 = vector.load %arg1[%c0, %c0_0] : memref<1x128xf32, #tpu.memory_space<vmem>>, vector<1x128xf32>
    %9 = vector.broadcast %7 : vector<2x1xf32> to vector<2x128xf32>
    %10 = vector.broadcast %8 : vector<1x128xf32> to vector<2x128xf32>
    %11 = arith.addf %9, %10 : vector<2x128xf32>
    %cst_1 = arith.constant 1.000000e+00 : f32
    %12 = vector.broadcast %cst_1 : f32 to vector<2x128xf32>
    %13 = arith.mulf %11, %12 : vector<2x128xf32>
    %c0_2 = arith.constant 0 : index
    %c0_3 = arith.constant 0 : index
    %14 = vector.load %arg2[%c0_2, %c0_3] : memref<1x128xf32, #tpu.memory_space<vmem>>, vector<1x128xf32>
    %15 = vector.broadcast %14 : vector<1x128xf32> to vector<2x128xf32>
    %16 = arith.mulf %13, %15 : vector<2x128xf32>
    %17 = math.cos %16 : vector<2x128xf32>
    %18 = math.sin %16 : vector<2x128xf32>
    %c0_4 = arith.constant 0 : index
    %c0_5 = arith.constant 0 : index
    %19 = vector.load %arg3[%c0_4, %c0_5] : memref<2x128xf32, #tpu.memory_space<vmem>>, vector<2x128xf32>
    tpu.vector_store %arg3[%c0_4, %c0_5], %17 {strides = array<i32>} : memref<2x128xf32, #tpu.memory_space<vmem>>, vector<2x128xf32>,
    %c0_6 = arith.constant 0 : index
    %c0_7 = arith.constant 0 : index
    %20 = vector.load %arg4[%c0_6, %c0_7] : memref<2x128xf32, #tpu.memory_space<vmem>>, vector<2x128xf32>
    tpu.vector_store %arg4[%c0_6, %c0_7], %18 {strides = array<i32>} : memref<2x128xf32, #tpu.memory_space<vmem>>, vector<2x128xf32>,
    return
  }
  func.func @transform_0(%arg0: i32) -> (i32, i32) {
    %c0_i32 = arith.constant 0 : i32
    %c0_i32_0 = arith.constant 0 : i32
    %c0_i32_1 = arith.constant 0 : i32
    return %c0_i32, %c0_i32_0 : i32, i32
  }
  func.func @transform_1(%arg0: i32) -> (i32, i32) {
    %c0_i32 = arith.constant 0 : i32
    %c0_i32_0 = arith.constant 0 : i32
    %c0_i32_1 = arith.constant 0 : i32
    return %c0_i32, %c0_i32_0 : i32, i32
  }
  func.func @transform_2(%arg0: i32) -> (i32, i32) {
    %c0_i32 = arith.constant 0 : i32
    %c0_i32_0 = arith.constant 0 : i32
    return %arg0, %c0_i32 : i32, i32
  }
  func.func @transform_3(%arg0: i32) -> (i32, i32) {
    %c0_i32 = arith.constant 0 : i32
    %c0_i32_0 = arith.constant 0 : i32
    return %arg0, %c0_i32 : i32, i32
  }
}

</mosaic_0001>

<llo_original>
// kernel: tpu_custom_call.1
$region0: #{tpu_custom_call.1}
  #allocation0 [shape = 'u32[]', space=smem, size = 0x4, offset = 0x4, fixed_abs, tag = 'smem constant byte address 0x4 - core index']
  #allocation1 [shape = 'u32[144,128]{1,0:T(1,128)}', space=vmem, size = 0x12000, scoped, tag = 'internal scratch']
  %s0 = inlined_call_operand.hbm [shape: f32[1,128], index: 0, kind: input, shape index: {}]
  %s1 = inlined_call_operand.vmem [shape: f32[1,128], index: 1, kind: input, shape index: {}]
  %s2 = inlined_call_operand.hbm [shape: f32[2,128], index: 2, kind: output, shape index: {0}]
  %s3 = inlined_call_operand.hbm [shape: f32[2,128], index: 3, kind: output, shape index: {1}]
  %4 = xla_tuple %s2, %s3
  %s5 = sld [smem:[#allocation0]]
  $region30: #{tpu_custom_call.1} parent=0
    _
  %s7 = ssub.s32 1, %s5
  %s8 = scalar_select 0, %s7, %s5
  $region1: #{tpu_custom_call.1} parent=0
    #allocation2 [shape = 'u8[512]{0}', space=vmem, size = 0x400, scoped, tag = 'input window, operand 0, single buffered']
    #allocation3 [shape = 's32[1]{0}', space=sflag, size = 0x4, scoped, tag = 'scoped memory for tpu_custom_call.1']
    #allocation4 [shape = 's32[1]{0}', space=sflag, size = 0x4, scoped, tag = 'scoped memory for tpu_custom_call.1']
    #allocation5 [shape = 'u8[1024]{0}', space=vmem, size = 0x400, scoped, tag = 'output window, operand 0, single buffered']
    #allocation6 [shape = 'u8[1024]{0}', space=vmem, size = 0x400, scoped, tag = 'output window, operand 1, single buffered']
    #allocation7 [shape = 's32[1]{0}', space=sflag, size = 0x4, scoped, tag = 'scoped memory for tpu_custom_call.1']
    %9 = vsyncpa [#allocation3], 0
    %10 = vsyncpa [#allocation4], 0
    %11 = vsyncpa [#allocation7], 0
    // Predicated region
    $region2: #{tpu_custom_call.1} parent=1 // pred_check
      _
    $region3: #{tpu_custom_call.1} parent=1 // pred_check_branch
      %13 = sbr.rel (0) target = $region5
    $region4: #{tpu_custom_call.1} parent=1 // pred_region
      %s15 = ssub.s32 16, 16
      %16 = vsyncadd [#allocation3], %s15
      %s18 = sshll.u32 [#allocation2], 4
      %s19 = int_to_ptr.vmem [resolvable:$true] %s18
      %21 = dma.hbm_to_vmem [thread:$0]  %s0, 16, %s19, [#allocation3]
    $region5: #{tpu_custom_call.1} parent=1 // pred_fallthru
      _
    // Predicated region
    $region6: #{tpu_custom_call.1} parent=1 // pred_check
      _
    $region7: #{tpu_custom_call.1} parent=1 // pred_check_branch
      %23 = sbr.rel (0) target = $region9
    $region8: #{tpu_custom_call.1} parent=1 // pred_region
      _
    $region9: #{tpu_custom_call.1} parent=1 // pred_fallthru
      _
    // Predicated region
    $region10: #{tpu_custom_call.1} parent=1 // pred_check
      _
    $region11: #{tpu_custom_call.1} parent=1 // pred_check_branch
      %25 = sbr.rel (0) target = $region13
    $region12: #{tpu_custom_call.1} parent=1 // pred_region
      %26 = dma.done [#allocation3], 16
    $region13: #{tpu_custom_call.1} parent=1 // pred_fallthru
      _
    %s27 = smul.u32 0, 2
    %s28 = scvt.s32.f32 %s27
    %v29 = vlaneseq
    %v30 = vshrl.u32 %v29, 7
    %v31 = vcvt.s32.f32 %v30
    %v32 = vstv %s28
    %v33 = vadd.f32 %v31, %v32
    %v34 = vmul.f32 %v33, 4.0
    %v35 = vld [vmem:[#allocation2] sm:$0x1]
    %v37 = vlaneseq
    %v38 = vshrl.u32 %v37, 7
    %v39 = vsub.s32 0, %v38
    %v40 = vrot.slane %v35, %v39
    %v42 = vadd.f32 %v34, %v40
    %v43 = vld [vmem:[%s1] sm:$0x1]
    %v45 = vlaneseq
    %v46 = vshrl.u32 %v45, 7
    %v47 = vsub.s32 0, %v46
    %v48 = vrot.slane %v43, %v47
    %v50 = vmul.f32 %v42, %v48
    %v51 = vand.u32 2147483647, %v50
    %vm52 = vcmp.le.f32.partialorder %v51, 0.7853982
    %vm53 = vcmp.lt.s32.totalorder %v50, 0
    %v54 = vand.u32 %v50, 2139095040
    %v55 = vshrl.u32 %v54, 23
    %v56 = vsub.s32 %v55, 127
    %v57 = vand.u32 2147483647, %v50
    %v58 = vand.u32 %v57, 8388607
    %v59 = vor.u32 %v58, 8388608
    %v60 = vsub.s32 0, %v59
    %v61 = vadd.s32 %v56, 1
    %vm62 = vcmp.gt.s32.totalorder %v61, 0
    %v63 = vsel %vm62, %v61, 0
    %v64 = vshrl.u32 %v63, 5
    %v65 = vand.u32 %v63, 31
    %v66 = vsub.s32 32, %v65
    %v67 = vshrl.u32 683565275, %v66
    %v68 = vshll.u32 683565275, %v65
    %v69 = vshrl.u32 2475754826, %v66
    %v70 = vor.u32 %v68, %v69
    %v71 = vshll.u32 2475754826, %v65
    %v72 = vshrl.u32 2131351028, %v66
    %v73 = vor.u32 %v71, %v72
    %v74 = vshll.u32 2131351028, %v65
    %v75 = vshrl.u32 2102212464, %v66
    %v76 = vor.u32 %v74, %v75
    %v77 = vshll.u32 2102212464, %v65
    %v78 = vshrl.u32 920167782, %v66
    %v79 = vor.u32 %v77, %v78
    %v80 = vshll.u32 920167782, %v65
    %v81 = vshrl.u32 1326507024, %v66
    %v82 = vor.u32 %v80, %v81
    %vm83 = vcmp.lt.s32.totalorder %v64, 1
    %vm84 = vcmp.lt.s32.totalorder %v64, 2
    %vm85 = vcmp.lt.s32.totalorder %v64, 3
    %vm86 = vcmp.lt.s32.totalorder %v64, 4
    %v87 = vsel %vm83, %v67, %v70
    %v88 = vsel %vm86, %v76, 2102212464
    %v89 = vsel %vm85, %v73, %v88
    %v90 = vsel %vm84, %v87, %v89
    %v91 = vsel %vm83, %v70, %v73
    %v92 = vsel %vm86, %v79, 920167782
    %v93 = vsel %vm85, %v76, %v92
    %v94 = vsel %vm84, %v91, %v93
    %v95 = vsel %vm83, %v73, %v76
    %v96 = vsel %vm86, %v82, 1326507024
    %v97 = vsel %vm85, %v79, %v96
    %v98 = vsel %vm84, %v95, %v97
    %v99 = vshll.u32 %v59, 8
    %v100 = vmul.u32.u64.compose %v99, %v98
    %v101 = vextract.low.u32 %v100
    %v102 = vextract.high.u32 %v100
    %v103 = vmul.u32.u64.compose %v99, %v94
    %v104 = vextract.low.u32 %v103
    %v105 = vextract.high.u32 %v103
    %v106 = vmul.u32 %v99, %v90
    %v107 = vadd.s32 %v102, %v104
    %vm108 = vc.u32 %v102, %v104
    %v109 = vadd.s32 %v105, 1
    %v110 = vsel %vm108, %v109, %v105
    %v111 = vadd.s32 %v106, %v110
    %v112 = vadd.s32 %v111, 536870912
    %v113 = vshrl.u32 %v112, 30
    %v114 = vshll.u32 %v113, 30
    %v115 = vsub.s32 %v111, %v114
    %vm116 = vcmp.lt.s32.totalorder %v115, 0
    %v117 = vsub.s32 0, %v115
    %v118 = vsel %vm116, %v117, %v115
    %v119 = vclz %v118
    %v120 = vsub.s32 %v119, 2
    %vm121 = vcmp.gt.s32.totalorder 0, %v120
    %v122 = vsel %vm121, 0, %v120
    %v123 = vsub.s32 32, %v122
    %v124 = vshll.u32 %v115, %v122
    %v125 = vshrl.u32 %v107, %v123
    %v126 = vor.u32 %v124, %v125
    %v127 = vsub.s32 4294967266, %v122
    %v128 = vadd.s32 %v127, 127
    %v129 = vshll.u32 %v128, 23
    %v130 = vor.u32 4788187, %v129
    %v131 = vand.u32 2147483647, %v130
    %v133 = vcvt.s32.f32 %v126
    %v134 = vmul.f32 %v133, %v131
    %v135 = vxor.u32 %v134, 2147483648
    %v136 = vsel %vm53, %v135, %v134
    %v137 = vsub.s32 4, %v113
    %v138 = vsel %vm53, %v137, %v113
    %v139 = vsel %vm52, %v50, %v136
    %v140 = vsel %vm52, 0, %v138
    %v141 = vcosq.f32.pop %v139
    %v142 = vsinq.f32.pop %v139
    %vm143 = vweird.f32 %v50
    %v144 = vand.u32 %v140, 3
    %vm145 = vcmp.lt.s32.totalorder %v144, 2
    %vm146 = vcmp.eq.s32.totalorder %v144, 0
    %v147 = vxor.u32 %v142, 2147483648
    %v148 = vsel %vm146, %v141, %v147
    %vm149 = vcmp.eq.s32.totalorder %v144, 2
    %v150 = vxor.u32 %v141, 2147483648
    %v151 = vsel %vm149, %v150, %v142
    %v152 = vsel %vm145, %v148, %v151
    %v153 = vsel %vm143, nan, %v152
    %v154 = vand.u32 2147483647, %v50
    %vm155 = vcmp.le.f32.partialorder %v154, 0.7853982
    %vm156 = vcmp.lt.s32.totalorder %v50, 0
    %v157 = vand.u32 %v50, 2139095040
    %v158 = vshrl.u32 %v157, 23
    %v159 = vsub.s32 %v158, 127
    %v160 = vand.u32 2147483647, %v50
    %v161 = vand.u32 %v160, 8388607
    %v162 = vor.u32 %v161, 8388608
    %v163 = vsub.s32 0, %v162
    %v164 = vadd.s32 %v159, 1
    %vm165 = vcmp.gt.s32.totalorder %v164, 0
    %v166 = vsel %vm165, %v164, 0
    %v167 = vshrl.u32 %v166, 5
    %v168 = vand.u32 %v166, 31
    %v169 = vsub.s32 32, %v168
    %v170 = vshrl.u32 683565275, %v169
    %v171 = vshll.u32 683565275, %v168
    %v172 = vshrl.u32 2475754826, %v169
    %v173 = vor.u32 %v171, %v172
    %v174 = vshll.u32 2475754826, %v168
    %v175 = vshrl.u32 2131351028, %v169
    %v176 = vor.u32 %v174, %v175
    %v177 = vshll.u32 2131351028, %v168
    %v178 = vshrl.u32 2102212464, %v169
    %v179 = vor.u32 %v177, %v178
    %v180 = vshll.u32 2102212464, %v168
    %v181 = vshrl.u32 920167782, %v169
    %v182 = vor.u32 %v180, %v181
    %v183 = vshll.u32 920167782, %v168
    %v184 = vshrl.u32 1326507024, %v169
    %v185 = vor.u32 %v183, %v184
    %vm186 = vcmp.lt.s32.totalorder %v167, 1
    %vm187 = vcmp.lt.s32.totalorder %v167, 2
    %vm188 = vcmp.lt.s32.totalorder %v167, 3
    %vm189 = vcmp.lt.s32.totalorder %v167, 4
    %v190 = vsel %vm186, %v170, %v173
    %v191 = vsel %vm189, %v179, 2102212464
    %v192 = vsel %vm188, %v176, %v191
    %v193 = vsel %vm187, %v190, %v192
    %v194 = vsel %vm186, %v173, %v176
    %v195 = vsel %vm189, %v182, 920167782
    %v196 = vsel %vm188, %v179, %v195
    %v197 = vsel %vm187, %v194, %v196
    %v198 = vsel %vm186, %v176, %v179
    %v199 = vsel %vm189, %v185, 1326507024
    %v200 = vsel %vm188, %v182, %v199
    %v201 = vsel %vm187, %v198, %v200
    %v202 = vshll.u32 %v162, 8
    %v203 = vmul.u32.u64.compose %v202, %v201
    %v204 = vextract.low.u32 %v203
    %v205 = vextract.high.u32 %v203
    %v206 = vmul.u32.u64.compose %v202, %v197
    %v207 = vextract.low.u32 %v206
    %v208 = vextract.high.u32 %v206
    %v209 = vmul.u32 %v202, %v193
    %v210 = vadd.s32 %v205, %v207
    %vm211 = vc.u32 %v205, %v207
    %v212 = vadd.s32 %v208, 1
    %v213 = vsel %vm211, %v212, %v208
    %v214 = vadd.s32 %v209, %v213
    %v215 = vadd.s32 %v214, 536870912
    %v216 = vshrl.u32 %v215, 30
    %v217 = vshll.u32 %v216, 30
    %v218 = vsub.s32 %v214, %v217
    %vm219 = vcmp.lt.s32.totalorder %v218, 0
    %v220 = vsub.s32 0, %v218
    %v221 = vsel %vm219, %v220, %v218
    %v222 = vclz %v221
    %v223 = vsub.s32 %v222, 2
    %vm224 = vcmp.gt.s32.totalorder 0, %v223
    %v225 = vsel %vm224, 0, %v223
    %v226 = vsub.s32 32, %v225
    %v227 = vshll.u32 %v218, %v225
    %v228 = vshrl.u32 %v210, %v226
    %v229 = vor.u32 %v227, %v228
    %v230 = vsub.s32 4294967266, %v225
    %v231 = vadd.s32 %v230, 127
    %v232 = vshll.u32 %v231, 23
    %v233 = vor.u32 4788187, %v232
    %v234 = vand.u32 2147483647, %v233
    %v236 = vcvt.s32.f32 %v229
    %v237 = vmul.f32 %v236, %v234
    %v238 = vxor.u32 %v237, 2147483648
    %v239 = vsel %vm156, %v238, %v237
    %v240 = vsub.s32 4, %v216
    %v241 = vsel %vm156, %v240, %v216
    %v242 = vsel %vm155, %v50, %v239
    %v243 = vsel %vm155, 0, %v241
    %v244 = vcosq.f32.pop %v242
    %v245 = vsinq.f32.pop %v242
    %vm246 = vweird.f32 %v50
    %v247 = vadd.s32 %v243, 3
    %v248 = vand.u32 %v247, 3
    %vm249 = vcmp.lt.s32.totalorder %v248, 2
    %vm250 = vcmp.eq.s32.totalorder %v248, 0
    %v251 = vxor.u32 %v245, 2147483648
    %v252 = vsel %vm250, %v244, %v251
    %vm253 = vcmp.eq.s32.totalorder %v248, 2
    %v254 = vxor.u32 %v244, 2147483648
    %v255 = vsel %vm253, %v254, %v245
    %v256 = vsel %vm249, %v252, %v255
    %v257 = vsel %vm246, nan, %v256
    %258 = vst [vmem:[#allocation5] sm:$0x3] %v153
    %259 = vst [vmem:[#allocation6] sm:$0x3] %v257
    // Predicated region
    $region14: #{tpu_custom_call.1} parent=1 // pred_check
      _
    $region15: #{tpu_custom_call.1} parent=1 // pred_check_branch
      %261 = sbr.rel (0) target = $region17
    $region16: #{tpu_custom_call.1} parent=1 // pred_region
      %s263 = ssub.s32 32, 32
      %264 = vsyncadd [#allocation4], %s263
      %s266 = sshll.u32 [#allocation5], 4
      %s267 = int_to_ptr.vmem [resolvable:$true] %s266
      %269 = dma.vmem_to_hbm [thread:$0]  %s267, 32, %s2, [#allocation4]
    $region17: #{tpu_custom_call.1} parent=1 // pred_fallthru
      _
    // Predicated region
    $region18: #{tpu_custom_call.1} parent=1 // pred_check
      _
    $region19: #{tpu_custom_call.1} parent=1 // pred_check_branch
      %271 = sbr.rel (0) target = $region21
    $region20: #{tpu_custom_call.1} parent=1 // pred_region
      %s273 = ssub.s32 32, 32
      %274 = vsyncadd [#allocation7], %s273
      %s276 = sshll.u32 [#allocation6], 4
      %s277 = int_to_ptr.vmem [resolvable:$true] %s276
      %279 = dma.vmem_to_hbm [thread:$0]  %s277, 32, %s3, [#allocation7]
    $region21: #{tpu_custom_call.1} parent=1 // pred_fallthru
      _
    // Predicated region
    $region22: #{tpu_custom_call.1} parent=1 // pred_check
      _
    $region23: #{tpu_custom_call.1} parent=1 // pred_check_branch
      %281 = sbr.rel (0) target = $region25
    $region24: #{tpu_custom_call.1} parent=1 // pred_region
      %282 = dma.done [#allocation4], 32
    $region25: #{tpu_custom_call.1} parent=1 // pred_fallthru
      _
    // Predicated region
    $region26: #{tpu_custom_call.1} parent=1 // pred_check
      _
    $region27: #{tpu_custom_call.1} parent=1 // pred_check_branch
      %284 = sbr.rel (0) target = $region29
    $region28: #{tpu_custom_call.1} parent=1 // pred_region
      %285 = dma.done [#allocation7], 32
    $region29: #{tpu_custom_call.1} parent=1 // pred_fallthru
      _
    %286 = vsyncpa [#allocation3], 1
    %287 = vsyncpa [#allocation4], 1
    %288 = vsyncpa [#allocation7], 1

</llo_original>
